<compile_context>
chip_gen: v7x
topology: tpu7x:2x2x1
jax: 0.10.0
libtpu: 0.0.40
codegen_flags: <defaults>
</compile_context>

<pallas_src>
import functools

import jax
import jax.numpy as jnp
from jax.experimental import pallas as pl
from jax.experimental.pallas import tpu as pltpu


def _round_up(n, m):
    return ((n + m - 1) // m) * m


def _resident_spec(shape):
    """BlockSpec for a grid-invariant operand: constant index map, single buffer."""
    index_map = lambda i: (0,) * len(shape)
    if hasattr(pl, "Buffered"):
        try:
            return pl.BlockSpec(shape, index_map, pipeline_mode=pl.Buffered(1))
        except TypeError:
            pass  # older JAX without pipeline_mode: fall back to default buffering
    return pl.BlockSpec(shape, index_map)


def _ffn_kernel(x_ref, g_ref, lb_ref, w1_ref, b1_ref, w2_ref, b2_ref, o_ref, *, eps):
    """One row-tile of the position-wise FFN with residual layer norm.

    x_ref : (tm, D)  input rows (input dtype)
    g_ref : (1, D)   layer-norm gain (a_2), f32
    lb_ref: (1, D)   layer-norm bias (b_2), f32
    w1_ref: (D, H)   first linear weight, bf16
    b1_ref: (1, H)   first linear bias, f32
    w2_ref: (H, D)   second linear weight, bf16
    b2_ref: (1, D)   second linear bias, f32
    o_ref : (tm, D)  output rows
    """
    x = x_ref[...].astype(jnp.float32)                        # (tm, D)
    d = x.shape[-1]

    # --- LayerNorm (onmt flavor: unbiased std, divide by std + eps) ---
    mean = jnp.mean(x, axis=-1, keepdims=True)                # (tm, 1)
    xc = x - mean
    var = jnp.sum(xc * xc, axis=-1, keepdims=True) / (d - 1)
    std = jnp.sqrt(var)
    inv = pl.reciprocal(std + eps, approx=True)               # EUP slot, ~free
    normed = xc * inv
    normed = normed * g_ref[...] + lb_ref[...]

    # --- w_1 -> relu (bf16 MXU, f32 accumulate); dropout_1 identity in eval ---
    h = jnp.dot(normed.astype(w1_ref.dtype), w1_ref[...],
                preferred_element_type=jnp.float32)            # (tm, H)
    h = jnp.maximum(h + b1_ref[...], 0.0)

    # --- w_2 (bf16 MXU, f32 accumulate); dropout_2 identity in eval ---
    y = jnp.dot(h.astype(w2_ref.dtype), w2_ref[...],
                preferred_element_type=jnp.float32)            # (tm, D)
    y = y + b2_ref[...]

    # --- residual ---
    o_ref[...] = (y + x).astype(o_ref.dtype)


def positionwise_ffn(x, ln_g, ln_b, w1, b1, w2, b2, *, eps=1e-6, block_rows=None):
    """PositionwiseFeedForward.forward as a Pallas call.

    Args:
      x:    [..., D] input.
      ln_g: [D] layer-norm gain (a_2).
      ln_b: [D] layer-norm bias (b_2).
      w1:   [D, H], b1: [H]   (first linear, x @ w1 + b1).
      w2:   [H, D], b2: [D]   (second linear).
    Returns:
      [..., D] output = w_2(relu(w_1(LN(x)))) + x.
    """
    orig_shape = x.shape
    D = orig_shape[-1]
    H = w1.shape[1]
    x2 = x.reshape(-1, D)
    N = x2.shape[0]
    x_itemsize = jnp.dtype(x.dtype).itemsize

    # --- row-tile selection: big (>=256-aligned) but VMEM-bounded ---
    if block_rows is None:
        block_rows = 512
    block_rows = max(8, _round_up(min(block_rows, _round_up(N, 8)), 8))

    def vmem_need(tm):
        return (
            2 * 2 * tm * D * x_itemsize      # x + out tiles, double-buffered
            + 2 * D * H * 2                   # bf16 weights, single-buffered
            + tm * H * 4                      # f32 intermediate h
            + 2 * tm * D * 4                  # f32 x / normed working set
            + 4 * (3 * D + H)                 # small f32 vectors
        )

    vmem_budget = 48 << 20                    # fits v7x's 64 MiB physical VMEM
    while block_rows > 8 and vmem_need(block_rows) > vmem_budget:
        block_rows = _round_up(block_rows // 2, 8)

    grid = (pl.cdiv(N, block_rows),)          # partial last block handled by Pallas
    kernel = functools.partial(_ffn_kernel, eps=eps)

    vmem_limit = min(64 << 20, max(32 << 20, int(vmem_need(block_rows) * 1.5)))

    cost = pl.CostEstimate(
        flops=4 * N * D * H,                  # two matmuls
        transcendentals=N,                    # one reciprocal per row
        bytes_accessed=2 * N * D * x_itemsize + 2 * D * H * 2 + 4 * (3 * D + H),
    )

    out = pl.pallas_call(
        kernel,
        out_shape=jax.ShapeDtypeStruct((N, D), x.dtype),
        grid_spec=pltpu.PrefetchScalarGridSpec(
            num_scalar_prefetch=0,
            grid=grid,
            in_specs=[
                pl.BlockSpec((block_rows, D), lambda i: (i, 0)),   # x rows (pipelined)
                _resident_spec((1, D)),                            # ln gain
                _resident_spec((1, D)),                            # ln bias
                _resident_spec((D, H)),                            # w1 (bf16)
                _resident_spec((1, H)),                            # b1
                _resident_spec((H, D)),                            # w2 (bf16)
                _resident_spec((1, D)),                            # b2
            ],
            out_specs=pl.BlockSpec((block_rows, D), lambda i: (i, 0)),
        ),
        compiler_params=pltpu.CompilerParams(
            dimension_semantics=("parallel",),   # independent row tiles
            vmem_limit_bytes=vmem_limit,
        ),
        cost_estimate=cost,
    )(
        x2,
        ln_g.reshape(1, D).astype(jnp.float32),
        ln_b.reshape(1, D).astype(jnp.float32),
        w1.astype(jnp.bfloat16),
        b1.reshape(1, H).astype(jnp.float32),
        w2.astype(jnp.bfloat16),
        b2.reshape(1, D).astype(jnp.float32),
    )

    return out.reshape(orig_shape)


def _ffn_reference(x, ln_g, ln_b, w1, b1, w2, b2, eps=1e-6):
    """Pure-JAX reference matching the PyTorch module in eval mode.

    Uses the same bf16 weight cast / f32 accumulation as the kernel so that the
    comparison isolates kernel bugs rather than bf16 rounding.
    """
    xf = x.astype(jnp.float32)
    d = xf.shape[-1]
    mean = jnp.mean(xf, axis=-1, keepdims=True)
    xc = xf - mean
    var = jnp.sum(xc * xc, axis=-1, keepdims=True) / (d - 1)
    normed = ln_g * (xc / (jnp.sqrt(var) + eps)) + ln_b
    inter = jax.nn.relu(
        jnp.dot(normed.astype(jnp.bfloat16), w1.astype(jnp.bfloat16),
                preferred_element_type=jnp.float32) + b1)
    out = jnp.dot(inter.astype(jnp.bfloat16), w2.astype(jnp.bfloat16),
                  preferred_element_type=jnp.float32) + b2
    return (out + xf).astype(x.dtype)


if __name__ == "__main__":
    # Small shapes consistent with the module: batch=2, seq=8, size=32, hidden=64.
    B, S, D, H = 2, 8, 32, 64

    key = jax.random.PRNGKey(0)
    kx, kg, kb, kw1, kb1, kw2, kb2 = jax.random.split(key, 7)

    x = jax.random.normal(kx, (B, S, D), dtype=jnp.float32)
    ln_g = 1.0 + 0.1 * jax.random.normal(kg, (D,), dtype=jnp.float32)
    ln_b = 0.1 * jax.random.normal(kb, (D,), dtype=jnp.float32)
    w1 = jax.random.normal(kw1, (D, H), dtype=jnp.float32) * (1.0 / jnp.sqrt(D))
    b1 = 0.1 * jax.random.normal(kb1, (H,), dtype=jnp.float32)
    w2 = jax.random.normal(kw2, (H, D), dtype=jnp.float32) * (1.0 / jnp.sqrt(H))
    b2 = 0.1 * jax.random.normal(kb2, (D,), dtype=jnp.float32)

    fn = jax.jit(positionwise_ffn)
    out = fn(x, ln_g, ln_b, w1, b1, w2, b2)
    jax.block_until_ready(out)

    ref = _ffn_reference(x, ln_g, ln_b, w1, b1, w2, b2)
    assert out.shape == (B, S, D)
    # bf16 MXU path + approx reciprocal in LN -> relaxed tolerance vs reference.
    assert jnp.allclose(out, ref, atol=2e-2, rtol=2e-2), (
        f"max abs diff {jnp.max(jnp.abs(out - ref))}"
    )

    print("KERNEL_OK")
</pallas_src>

<mosaic_0001>
module attributes {stable_mosaic.version = 11 : i64} {
  func.func @_ffn_kernel(%arg0: i32, %arg1: memref<16x32xf32, #tpu.memory_space<vmem>>, %arg2: memref<1x32xf32, #tpu.memory_space<vmem>>, %arg3: memref<1x32xf32, #tpu.memory_space<vmem>>, %arg4: memref<32x64xbf16, #tpu.memory_space<vmem>>, %arg5: memref<1x64xf32, #tpu.memory_space<vmem>>, %arg6: memref<64x32xbf16, #tpu.memory_space<vmem>>, %arg7: memref<1x32xf32, #tpu.memory_space<vmem>>, %arg8: memref<16x32xf32, #tpu.memory_space<vmem>>) attributes {dimension_semantics = [#tpu.dimension_semantics<parallel>], iteration_bounds = array<i64: 1>, scalar_prefetch = 0 : i64, scratch_operands = 0 : i64, tpu.core_type = #tpu.core_type<tc>, window_params = [{transform_indices = @transform_0, window_bounds = array<i64: 16, 32>}, {pipeline_mode = #tpu.pipeline_mode<synchronous>, transform_indices = @transform_1, window_bounds = array<i64: 1, 32>}, {pipeline_mode = #tpu.pipeline_mode<synchronous>, transform_indices = @transform_2, window_bounds = array<i64: 1, 32>}, {pipeline_mode = #tpu.pipeline_mode<synchronous>, transform_indices = @transform_3, window_bounds = array<i64: 32, 64>}, {pipeline_mode = #tpu.pipeline_mode<synchronous>, transform_indices = @transform_4, window_bounds = array<i64: 1, 64>}, {pipeline_mode = #tpu.pipeline_mode<synchronous>, transform_indices = @transform_5, window_bounds = array<i64: 64, 32>}, {pipeline_mode = #tpu.pipeline_mode<synchronous>, transform_indices = @transform_6, window_bounds = array<i64: 1, 32>}, {transform_indices = @transform_7, window_bounds = array<i64: 16, 32>}]} {
    %c0 = arith.constant 0 : index
    %c0_0 = arith.constant 0 : index
    %0 = vector.load %arg1[%c0, %c0_0] : memref<16x32xf32, #tpu.memory_space<vmem>>, vector<16x32xf32>
    %cst = arith.constant dense<0.000000e+00> : vector<16xf32>
    %1 = vector.multi_reduction <add>, %0, %cst [1] : vector<16x32xf32> to vector<16xf32>
    %2 = vector.shape_cast %1 : vector<16xf32> to vector<16x1xf32>
    %cst_1 = arith.constant 3.200000e+01 : f32
    %3 = vector.broadcast %cst_1 : f32 to vector<16x1xf32>
    %4 = arith.divf %2, %3 : vector<16x1xf32>
    %5 = vector.broadcast %4 : vector<16x1xf32> to vector<16x32xf32>
    %6 = arith.subf %0, %5 : vector<16x32xf32>
    %7 = arith.mulf %6, %6 : vector<16x32xf32>
    %cst_2 = arith.constant dense<0.000000e+00> : vector<16xf32>
    %8 = vector.multi_reduction <add>, %7, %cst_2 [1] : vector<16x32xf32> to vector<16xf32>
    %9 = vector.shape_cast %8 : vector<16xf32> to vector<16x1xf32>
    %cst_3 = arith.constant 3.100000e+01 : f32
    %10 = vector.broadcast %cst_3 : f32 to vector<16x1xf32>
    %11 = arith.divf %9, %10 : vector<16x1xf32>
    %12 = math.sqrt %11 : vector<16x1xf32>
    %cst_4 = arith.constant 9.99999997E-7 : f32
    %13 = vector.broadcast %cst_4 : f32 to vector<16x1xf32>
    %14 = arith.addf %12, %13 : vector<16x1xf32>
    %15 = tpu.reciprocal %14 {approx = true} : vector<16x1xf32> -> vector<16x1xf32>
    %16 = vector.broadcast %15 : vector<16x1xf32> to vector<16x32xf32>
    %17 = arith.mulf %6, %16 : vector<16x32xf32>
    %c0_5 = arith.constant 0 : index
    %c0_6 = arith.constant 0 : index
    %18 = vector.load %arg2[%c0_5, %c0_6] : memref<1x32xf32, #tpu.memory_space<vmem>>, vector<1x32xf32>
    %19 = vector.broadcast %18 : vector<1x32xf32> to vector<16x32xf32>
    %20 = arith.mulf %17, %19 : vector<16x32xf32>
    %c0_7 = arith.constant 0 : index
    %c0_8 = arith.constant 0 : index
    %21 = vector.load %arg3[%c0_7, %c0_8] : memref<1x32xf32, #tpu.memory_space<vmem>>, vector<1x32xf32>
    %22 = vector.broadcast %21 : vector<1x32xf32> to vector<16x32xf32>
    %23 = arith.addf %20, %22 : vector<16x32xf32>
    %24 = arith.truncf %23 : vector<16x32xf32> to vector<16x32xbf16>
    %c0_9 = arith.constant 0 : index
    %c0_10 = arith.constant 0 : index
    %25 = vector.load %arg4[%c0_9, %c0_10] : memref<32x64xbf16, #tpu.memory_space<vmem>>, vector<32x64xbf16>
    %cst_11 = arith.constant dense<0.000000e+00> : vector<16x64xf32>
    %26 = tpu.matmul %24, %25, %cst_11 {dimension_numbers = #tpu.dot_dimension_numbers<[1], [0], [0], [1], [0, 0, 1, 1], [], []>} : vector<16x32xbf16>, vector<32x64xbf16>, vector<16x64xf32> -> vector<16x64xf32>
    %c0_12 = arith.constant 0 : index
    %c0_13 = arith.constant 0 : index
    %27 = vector.load %arg5[%c0_12, %c0_13] : memref<1x64xf32, #tpu.memory_space<vmem>>, vector<1x64xf32>
    %28 = vector.broadcast %27 : vector<1x64xf32> to vector<16x64xf32>
    %29 = arith.addf %26, %28 : vector<16x64xf32>
    %cst_14 = arith.constant 0.000000e+00 : f32
    %30 = vector.broadcast %cst_14 : f32 to vector<16x64xf32>
    %31 = arith.maximumf %29, %30 : vector<16x64xf32>
    %32 = arith.truncf %31 : vector<16x64xf32> to vector<16x64xbf16>
    %c0_15 = arith.constant 0 : index
    %c0_16 = arith.constant 0 : index
    %33 = vector.load %arg6[%c0_15, %c0_16] : memref<64x32xbf16, #tpu.memory_space<vmem>>, vector<64x32xbf16>
    %cst_17 = arith.constant dense<0.000000e+00> : vector<16x32xf32>
    %34 = tpu.matmul %32, %33, %cst_17 {dimension_numbers = #tpu.dot_dimension_numbers<[1], [0], [0], [1], [0, 0, 1, 1], [], []>} : vector<16x64xbf16>, vector<64x32xbf16>, vector<16x32xf32> -> vector<16x32xf32>
    %c0_18 = arith.constant 0 : index
    %c0_19 = arith.constant 0 : index
    %35 = vector.load %arg7[%c0_18, %c0_19] : memref<1x32xf32, #tpu.memory_space<vmem>>, vector<1x32xf32>
    %36 = vector.broadcast %35 : vector<1x32xf32> to vector<16x32xf32>
    %37 = arith.addf %34, %36 : vector<16x32xf32>
    %38 = arith.addf %37, %0 : vector<16x32xf32>
    %c0_20 = arith.constant 0 : index
    %c0_21 = arith.constant 0 : index
    %39 = vector.load %arg8[%c0_20, %c0_21] : memref<16x32xf32, #tpu.memory_space<vmem>>, vector<16x32xf32>
    tpu.vector_store %arg8[%c0_20, %c0_21], %38 {strides = array<i32>} : memref<16x32xf32, #tpu.memory_space<vmem>>, vector<16x32xf32>,
    return
  }
  func.func @transform_0(%arg0: i32) -> (i32, i32) {
    %c0_i32 = arith.constant 0 : i32
    %c0_i32_0 = arith.constant 0 : i32
    return %arg0, %c0_i32 : i32, i32
  }
  func.func @transform_1(%arg0: i32) -> (i32, i32) {
    %c0_i32 = arith.constant 0 : i32
    %c0_i32_0 = arith.constant 0 : i32
    %c0_i32_1 = arith.constant 0 : i32
    return %c0_i32, %c0_i32_0 : i32, i32
  }
  func.func @transform_2(%arg0: i32) -> (i32, i32) {
    %c0_i32 = arith.constant 0 : i32
    %c0_i32_0 = arith.constant 0 : i32
    %c0_i32_1 = arith.constant 0 : i32
    return %c0_i32, %c0_i32_0 : i32, i32
  }
  func.func @transform_3(%arg0: i32) -> (i32, i32) {
    %c0_i32 = arith.constant 0 : i32
    %c0_i32_0 = arith.constant 0 : i32
    %c0_i32_1 = arith.constant 0 : i32
    return %c0_i32, %c0_i32_0 : i32, i32
  }
  func.func @transform_4(%arg0: i32) -> (i32, i32) {
    %c0_i32 = arith.constant 0 : i32
    %c0_i32_0 = arith.constant 0 : i32
    %c0_i32_1 = arith.constant 0 : i32
    return %c0_i32, %c0_i32_0 : i32, i32
  }
  func.func @transform_5(%arg0: i32) -> (i32, i32) {
    %c0_i32 = arith.constant 0 : i32
    %c0_i32_0 = arith.constant 0 : i32
    %c0_i32_1 = arith.constant 0 : i32
    return %c0_i32, %c0_i32_0 : i32, i32
  }
  func.func @transform_6(%arg0: i32) -> (i32, i32) {
    %c0_i32 = arith.constant 0 : i32
    %c0_i32_0 = arith.constant 0 : i32
    %c0_i32_1 = arith.constant 0 : i32
    return %c0_i32, %c0_i32_0 : i32, i32
  }
  func.func @transform_7(%arg0: i32) -> (i32, i32) {
    %c0_i32 = arith.constant 0 : i32
    %c0_i32_0 = arith.constant 0 : i32
    return %arg0, %c0_i32 : i32, i32
  }
}

</mosaic_0001>

<llo_original>
// kernel: positionwise_ffn.1
$region0: #{positionwise_ffn.1}
  #allocation0 [shape = 'u32[]', space=smem, size = 0x4, offset = 0x4, fixed_abs, tag = 'smem constant byte address 0x4 - core index']
  #allocation1 [shape = 'u32[144,128]{1,0:T(1,128)}', space=vmem, size = 0x12000, scoped, tag = 'internal scratch']
  %s0 = inlined_call_operand.vmem [shape: f32[16,32], index: 0, kind: input, shape index: {}]
  %s1 = inlined_call_operand.vmem [shape: f32[1,32], index: 1, kind: input, shape index: {}]
  %s2 = inlined_call_operand.vmem [shape: f32[1,32], index: 2, kind: input, shape index: {}]
  %s3 = inlined_call_operand.vmem [shape: bf16[32,64], index: 3, kind: input, shape index: {}]
  %s4 = inlined_call_operand.vmem [shape: f32[1,64], index: 4, kind: input, shape index: {}]
  %s5 = inlined_call_operand.vmem [shape: bf16[64,32], index: 5, kind: input, shape index: {}]
  %s6 = inlined_call_operand.vmem [shape: f32[1,32], index: 6, kind: input, shape index: {}]
  %s7 = inlined_call_operand.hbm [shape: f32[16,32], index: 7, kind: output, shape index: {}]
  %s8 = sld [smem:[#allocation0]]
  $region38: #{positionwise_ffn.1} parent=0
    _
  %s10 = ssub.s32 1, %s8
  %s11 = scalar_select 0, %s10, %s8
  $region1: #{positionwise_ffn.1} parent=0
    #allocation2 [shape = 'u8[8192]{0}', space=vmem, size = 0x2000, scoped, tag = 'output window, operand 0, single buffered']
    #allocation3 [shape = 's32[1]{0}', space=sflag, size = 0x4, scoped, tag = 'scoped memory for positionwise_ffn.1']
    %12 = vsyncpa [#allocation3], 0
    // Predicated region
    $region2: #{positionwise_ffn.1} parent=1 // pred_check
      _
    $region3: #{positionwise_ffn.1} parent=1 // pred_check_branch
      %14 = sbr.rel (0) target = $region5
    $region4: #{positionwise_ffn.1} parent=1 // pred_region
      _
    $region5: #{positionwise_ffn.1} parent=1 // pred_fallthru
      _
    // Predicated region
    $region6: #{positionwise_ffn.1} parent=1 // pred_check
      _
    $region7: #{positionwise_ffn.1} parent=1 // pred_check_branch
      %16 = sbr.rel (0) target = $region9
    $region8: #{positionwise_ffn.1} parent=1 // pred_region
      _
    $region9: #{positionwise_ffn.1} parent=1 // pred_fallthru
      _
    // Predicated region
    $region10: #{positionwise_ffn.1} parent=1 // pred_check
      _
    $region11: #{positionwise_ffn.1} parent=1 // pred_check_branch
      %18 = sbr.rel (0) target = $region13
    $region12: #{positionwise_ffn.1} parent=1 // pred_region
      _
    $region13: #{positionwise_ffn.1} parent=1 // pred_fallthru
      _
    // Predicated region
    $region14: #{positionwise_ffn.1} parent=1 // pred_check
      _
    $region15: #{positionwise_ffn.1} parent=1 // pred_check_branch
      %20 = sbr.rel (0) target = $region17
    $region16: #{positionwise_ffn.1} parent=1 // pred_region
      _
    $region17: #{positionwise_ffn.1} parent=1 // pred_fallthru
      _
    // Predicated region
    $region18: #{positionwise_ffn.1} parent=1 // pred_check
      _
    $region19: #{positionwise_ffn.1} parent=1 // pred_check_branch
      %22 = sbr.rel (0) target = $region21
    $region20: #{positionwise_ffn.1} parent=1 // pred_region
      _
    $region21: #{positionwise_ffn.1} parent=1 // pred_fallthru
      _
    // Predicated region
    $region22: #{positionwise_ffn.1} parent=1 // pred_check
      _
    $region23: #{positionwise_ffn.1} parent=1 // pred_check_branch
      %24 = sbr.rel (0) target = $region25
    $region24: #{positionwise_ffn.1} parent=1 // pred_region
      _
    $region25: #{positionwise_ffn.1} parent=1 // pred_fallthru
      _
    // Predicated region
    $region26: #{positionwise_ffn.1} parent=1 // pred_check
      _
    $region27: #{positionwise_ffn.1} parent=1 // pred_check_branch
      %26 = sbr.rel (0) target = $region29
    $region28: #{positionwise_ffn.1} parent=1 // pred_region
      _
    $region29: #{positionwise_ffn.1} parent=1 // pred_fallthru
      _
    %v28 = vld [vmem:[%s0] sm:$0xff]
    %v29 = vld [vmem:[%s0 + $0x8] sm:$0xff]
    %vm30 = vcmask 261120
    %v31 = vsel %vm30, %v28, 0.0
    %32 = vadd.xlane.f32.xlu0 %v31
    %v33 = vpop.xlane.xlu0 %32
    %v34 = vsel %vm30, %v29, 0.0
    %35 = vadd.xlane.f32.xlu0 %v34
    %v36 = vpop.xlane.xlu0 %35
    %v37 = vrcp.pop 32.0
    %v38 = vmul.f32 %v33, %v37
    %v39 = vmul.f32 %v36, %v37
    %v40 = vsub.f32 %v28, %v38
    %v41 = vsub.f32 %v29, %v39
    %v42 = vmul.f32 %v40, %v40
    %v43 = vmul.f32 %v41, %v41
    %v44 = vsel %vm30, %v42, 0.0
    %45 = vadd.xlane.f32.xlu0 %v44
    %v46 = vpop.xlane.xlu0 %45
    %v47 = vsel %vm30, %v43, 0.0
    %48 = vadd.xlane.f32.xlu0 %v47
    %v49 = vpop.xlane.xlu0 %48
    %v50 = vrcp.pop 31.0
    %v51 = vmul.f32 %v46, %v50
    %v52 = vmul.f32 %v49, %v50
    %v53 = vrsqrt.pop %v51
    %v54 = vmul.f32 %v51, %v53
    %vm55 = vcmp.eq.f32.partialorder %v51, inf
    %v56 = vsel %vm55, %v51, %v54
    %vm57 = vcmp.eq.f32.partialorder %v51, 0.0
    %v58 = vand.u32 %v51, 2147483648
    %v59 = vsel %vm57, %v58, %v56
    %v60 = vrsqrt.pop %v52
    %v61 = vmul.f32 %v52, %v60
    %vm62 = vcmp.eq.f32.partialorder %v52, inf
    %v63 = vsel %vm62, %v52, %v61
    %vm64 = vcmp.eq.f32.partialorder %v52, 0.0
    %v65 = vand.u32 %v52, 2147483648
    %v66 = vsel %vm64, %v65, %v63
    %v67 = vadd.f32 %v59, 1e-06
    %v68 = vadd.f32 %v66, 1e-06
    %v69 = vrcp.pop %v67
    %v70 = vrcp.pop %v68
    %v71 = vmul.f32 %v40, %v69
    %v72 = vmul.f32 %v41, %v70
    %v73 = vld [vmem:[%s1] sm:$0x1]
    %v75 = vlaneseq
    %v76 = vshrl.u32 %v75, 7
    %v77 = vsub.s32 0, %v76
    %v78 = vrot.slane %v73, %v77
    %v80 = vmul.f32 %v71, %v78
    %v81 = vmul.f32 %v72, %v78
    %v82 = vld [vmem:[%s2] sm:$0x1]
    %v84 = vlaneseq
    %v85 = vshrl.u32 %v84, 7
    %v86 = vsub.s32 0, %v85
    %v87 = vrot.slane %v82, %v86
    %v89 = vadd.f32 %v80, %v87
    %v90 = vadd.f32 %v81, %v87
    %v91 = vpack.c.bf16 %v90, %v89
    %v92 = vld [vmem:[%s3] sm:$0xf]
    %v93 = vld [vmem:[%s3 + $0x4] sm:$0xf]
    %v94 = vld [vmem:[%s3 + $0x8] sm:$0xf]
    %v95 = vld [vmem:[%s3 + $0xc] sm:$0xf]
    %v96 = vld [vmem:[%s4] sm:$0x1]
    %v98 = vlaneseq
    %v99 = vshrl.u32 %v98, 7
    %v100 = vsub.s32 0, %v99
    %v101 = vrot.slane %v96, %v100
    %v107 = vunpack.c.l.b16 %v92
    %v108 = vunpack.c.l.b16 %v93
    %v109 = vunpack.c.l.b16 %v94
    %v110 = vunpack.c.l.b16 %v95
    %v111 = vpack.c.b16 %v108, %v107
    %v112 = vpack.c.b16 %v110, %v109
    %v116 = vsel %vm30, %v91, 0
    %118 = vmatprep.subr.bf16.mxu0 0
    %119 = vmatpush1.bf16.msra.mxu0 %v111
    %120 = vmatprep.subr.bf16.mxu0 0
    %121 = vmatpush1.bf16.msra.mxu0 %v112
    %122 = vmatprep.subr.bf16.mxu0 0
    %123 = vmatpush1.bf16.msra.mxu0 0
    %124 = vmatprep.subr.bf16.mxu0 0
    %125 = vmatpush1.bf16.msra.mxu0 0
    %126 = vmatprep.subr.bf16.mxu0 0
    %127 = vmatpush1.bf16.msra.mxu0 0
    %128 = vmatprep.subr.bf16.mxu0 0
    %129 = vmatpush1.bf16.msra.mxu0 0
    %130 = vmatprep.subr.bf16.mxu0 0
    %131 = vmatpush1.bf16.msra.mxu0 0
    %132 = vmatprep.subr.bf16.mxu0 0
    %133 = vmatpush1.bf16.msra.mxu0 0
    %134 = vmatprep.subr.bf16.mxu0 0
    %135 = vmatpush1.bf16.msra.mxu0 0
    %136 = vmatprep.subr.bf16.mxu0 0
    %137 = vmatpush1.bf16.msra.mxu0 0
    %138 = vmatprep.subr.bf16.mxu0 0
    %139 = vmatpush1.bf16.msra.mxu0 0
    %140 = vmatprep.subr.bf16.mxu0 0
    %141 = vmatpush1.bf16.msra.mxu0 0
    %142 = vmatprep.subr.bf16.mxu0 0
    %143 = vmatpush1.bf16.msra.mxu0 0
    %144 = vmatprep.subr.bf16.mxu0 0
    %145 = vmatpush1.bf16.msra.mxu0 0
    %146 = vmatprep.subr.bf16.mxu0 0
    %147 = vmatpush1.bf16.msra.mxu0 0
    %148 = vmatprep.subr.bf16.mxu0 0
    %149 = vmatpush1.bf16.msra.mxu0 0
    %150 = vmatprep.mubr.bf16.mxu0 0
    %151 = vmatmul.mubr.bf16.gmra.mrb[0].mxu0 %v116
    %v152 = vpop.f32.mrb[0].mxu0
    %v153 = vadd.f32 %v101, %v152
    %v154 = vpop.f32.mrb[0].mxu0
    %v155 = vpop.f32.mrb[0].mxu0
    %v156 = vadd.f32 %v101, %v155
    %v157 = vpop.f32.mrb[0].mxu0
    %158 = vdwg.mxu0
    %v159 = vmax.f32 %v153, 0.0
    %v160 = vmax.f32 %v156, 0.0
    %v161 = vpack.c.bf16 %v160, %v159
    %v162 = vld [vmem:[%s5] sm:$0xf]
    %v163 = vld [vmem:[%s5 + $0x4] sm:$0xf]
    %v164 = vld [vmem:[%s5 + $0x8] sm:$0xf]
    %v165 = vld [vmem:[%s5 + $0xc] sm:$0xf]
    %v166 = vld [vmem:[%s5 + $0x10] sm:$0xf]
    %v167 = vld [vmem:[%s5 + $0x14] sm:$0xf]
    %v168 = vld [vmem:[%s5 + $0x18] sm:$0xf]
    %v169 = vld [vmem:[%s5 + $0x1c] sm:$0xf]
    %v170 = vld [vmem:[%s6] sm:$0x1]
    %v172 = vlaneseq
    %v173 = vshrl.u32 %v172, 7
    %v174 = vsub.s32 0, %v173
    %v175 = vrot.slane %v170, %v174
    %v185 = vunpack.c.l.b16 %v162
    %v186 = vunpack.c.l.b16 %v163
    %v187 = vunpack.c.l.b16 %v164
    %v188 = vunpack.c.l.b16 %v165
    %v189 = vunpack.c.l.b16 %v166
    %v190 = vunpack.c.l.b16 %v167
    %v191 = vunpack.c.l.b16 %v168
    %v192 = vunpack.c.l.b16 %v169
    %v193 = vpack.c.b16 %v186, %v185
    %v194 = vpack.c.b16 %v188, %v187
    %v195 = vpack.c.b16 %v190, %v189
    %v196 = vpack.c.b16 %v192, %v191
    %vm201 = vcmask 523264
    %v203 = vsel %vm201, %v161, 0
    %205 = vmatprep.subr.bf16.mxu0 0
    %206 = vmatpush1.bf16.msra.mxu0 %v193
    %207 = vmatprep.subr.bf16.mxu0 0
    %208 = vmatpush1.bf16.msra.mxu0 %v194
    %209 = vmatprep.subr.bf16.mxu0 0
    %210 = vmatpush1.bf16.msra.mxu0 %v195
    %211 = vmatprep.subr.bf16.mxu0 0
    %212 = vmatpush1.bf16.msra.mxu0 %v196
    %213 = vmatprep.subr.bf16.mxu0 0
    %214 = vmatpush1.bf16.msra.mxu0 0
    %215 = vmatprep.subr.bf16.mxu0 0
    %216 = vmatpush1.bf16.msra.mxu0 0
    %217 = vmatprep.subr.bf16.mxu0 0
    %218 = vmatpush1.bf16.msra.mxu0 0
    %219 = vmatprep.subr.bf16.mxu0 0
    %220 = vmatpush1.bf16.msra.mxu0 0
    %221 = vmatprep.subr.bf16.mxu0 0
    %222 = vmatpush1.bf16.msra.mxu0 0
    %223 = vmatprep.subr.bf16.mxu0 0
    %224 = vmatpush1.bf16.msra.mxu0 0
    %225 = vmatprep.subr.bf16.mxu0 0
    %226 = vmatpush1.bf16.msra.mxu0 0
    %227 = vmatprep.subr.bf16.mxu0 0
    %228 = vmatpush1.bf16.msra.mxu0 0
    %229 = vmatprep.subr.bf16.mxu0 0
    %230 = vmatpush1.bf16.msra.mxu0 0
    %231 = vmatprep.subr.bf16.mxu0 0
    %232 = vmatpush1.bf16.msra.mxu0 0
    %233 = vmatprep.subr.bf16.mxu0 0
    %234 = vmatpush1.bf16.msra.mxu0 0
    %235 = vmatprep.subr.bf16.mxu0 0
    %236 = vmatpush1.bf16.msra.mxu0 0
    %237 = vmatprep.mubr.bf16.mxu0 0
    %238 = vmatmul.mubr.bf16.gmra.mrb[0].mxu0 %v203
    %v239 = vpop.f32.mrb[0].mxu0
    %v240 = vadd.f32 %v175, %v239
    %v241 = vpop.f32.mrb[0].mxu0
    %v242 = vpop.f32.mrb[0].mxu0
    %v243 = vadd.f32 %v175, %v242
    %v244 = vpop.f32.mrb[0].mxu0
    %245 = vdwg.mxu0
    %v246 = vadd.f32 %v240, %v28
    %v247 = vadd.f32 %v243, %v29
    %248 = vst.msk [vmem:[#allocation2] sm:$0xff] %vm30, %v246
    %249 = vst.msk [vmem:[#allocation2 + $0x8] sm:$0xff] %vm30, %v247
    // Predicated region
    $region30: #{positionwise_ffn.1} parent=1 // pred_check
      _
    $region31: #{positionwise_ffn.1} parent=1 // pred_check_branch
      %251 = sbr.rel (0) target = $region33
    $region32: #{positionwise_ffn.1} parent=1 // pred_region
      %s253 = ssub.s32 256, 256
      %254 = vsyncadd [#allocation3], %s253
      %s255 = sshll.u32 [#allocation2], 4
      %s256 = int_to_ptr.vmem [resolvable:$true] %s255
      %261 = dma.vmem_to_hbm [thread:$0]  %s256, 256, %s7, [#allocation3], 128, 128, 8
    $region33: #{positionwise_ffn.1} parent=1 // pred_fallthru
      _
    // Predicated region
    $region34: #{positionwise_ffn.1} parent=1 // pred_check
      _
    $region35: #{positionwise_ffn.1} parent=1 // pred_check_branch
      %263 = sbr.rel (0) target = $region37
    $region36: #{positionwise_ffn.1} parent=1 // pred_region
      %264 = dma.done [#allocation3], 256
    $region37: #{positionwise_ffn.1} parent=1 // pred_fallthru
      _
    %265 = vsyncpa [#allocation3], 1

</llo_original>
